<compile_context>
chip_gen: v7x
topology: tpu7x:2x2x1
jax: 0.10.0
libtpu: 0.0.40
codegen_flags: <defaults>
</compile_context>

<pallas_src>
import functools

import jax
import jax.numpy as jnp
from jax import lax
from jax.experimental import pallas as pl
from jax.experimental.pallas import tpu as pltpu


def _round_up(x: int, m: int) -> int:
    return ((x + m - 1) // m) * m


def _center_loss_kernel(ct_ref, ict_t_ref, x2s_ref, y2s_ref, out_ref, *,
                        neg_two_scale, clamp_nonneg):
    # ct_ref:    (tn, D)  tile of ct rows                  (cross dtype)
    # ict_t_ref: (D, tm)  tile of init_ct^T (K,N layout)   (cross dtype)
    # x2s_ref:   (tn, 1)  scale * ||ct||^2                 (f32)
    # y2s_ref:   (1, tm)  scale * ||init_ct||^2            (f32)
    # out_ref:   (tn, tm) output tile
    x = ct_ref[...]
    yT = ict_t_ref[...]

    # Cross term on the MXU; RHS is already (K, N) so no per-step transpose.
    xy = lax.dot_general(
        x, yT,
        dimension_numbers=(((1,), (0,)), ((), ())),
        preferred_element_type=jnp.float32,
    )  # (tn, tm)

    # scale*||x||^2 + scale*||y||^2 - 2*scale*(x.y); scale already folded into
    # the norms in the wrapper, so no separate per-element scale pass here.
    d2s = x2s_ref[...] + y2s_ref[...] + neg_two_scale * xy

    # Guard tiny negatives from cancellation (cdist^2 is non-negative; the
    # clamp direction follows the sign of the folded scale).
    d2s = jnp.maximum(d2s, 0.0) if clamp_nonneg else jnp.minimum(d2s, 0.0)

    out_ref[...] = d2s.astype(out_ref.dtype)


def center_loss(ct, init_ct, *, unit: float, weight: float = 1.0,
                tn: int | None = None, tm: int | None = None,
                out_dtype=None, cast_cross_to_bf16: bool = False):
    """Pallas TPU implementation of CenterLoss.forward for 2-D inputs."""
    N, D = ct.shape
    M, D2 = init_ct.shape
    assert D == D2, "feature dims must match"

    in_dtype = jnp.result_type(ct.dtype, init_ct.dtype)
    if out_dtype is None:
        out_dtype = in_dtype
    cross_dtype = jnp.bfloat16 if cast_cross_to_bf16 else in_dtype

    # ---- tile selection ------------------------------------------------
    # Rows aligned to 8 (sublanes), columns to 128 (lanes; lane-dense stores).
    if tn is None:
        tn = min(512, _round_up(N, 8))
    if tm is None:
        tm = min(512, _round_up(M, 128))
        # Megacore: if everything would fit in a single tile but M is large
        # enough, split columns into (at least) 2 tiles so v7x's 2 TCs both
        # get work along the "parallel" j axis.
        if pl.cdiv(N, tn) == 1 and pl.cdiv(M, tm) == 1 and _round_up(M, 128) >= 256:
            tm = _round_up(pl.cdiv(M, 2), 128)
    assert tn % 8 == 0 and tm % 128 == 0

    # VMEM-aware shrink (double-buffered input strips + output tiles + norms).
    in_bytes = jnp.dtype(cross_dtype).itemsize
    out_bytes = jnp.dtype(out_dtype).itemsize

    def _vmem_bytes(tn_, tm_):
        return (2 * tn_ * D * in_bytes        # ct tiles (double-buffered)
                + 2 * D * tm_ * in_bytes      # init_ct^T tiles
                + 2 * tn_ * tm_ * out_bytes   # output tiles
                + 2 * (tn_ + tm_) * 4)        # prescaled norm tiles

    budget = 40 << 20  # headroom under the 64 MiB limit set below (v7x-safe)
    while _vmem_bytes(tn, tm) > budget and (tn > 64 or tm > 128):
        if tn >= tm and tn > 64:
            tn = max(64, tn // 2)
        elif tm > 128:
            tm = max(128, tm // 2)
        else:
            break
    # TODO(synk): for very large D, a third "arbitrary" grid axis over D with
    # an f32 VMEM accumulator would keep big output tiles instead of shrinking.

    Np = _round_up(N, tn)
    Mp = _round_up(M, tm)

    # ---- wrapper-side prep (one-time XLA ops in HBM) ---------------------
    ct_p = ct if Np == N else jnp.pad(ct, ((0, Np - N), (0, 0)))
    ict_p = init_ct if Mp == M else jnp.pad(init_ct, ((0, Mp - M), (0, 0)))

    scale = float(weight) / float(unit)

    # Squared norms in f32 with the scale folded in (touches only Np+Mp values).
    x2s = scale * jnp.sum(ct_p.astype(jnp.float32) ** 2, axis=-1, keepdims=True)      # (Np, 1)
    y2s = scale * jnp.sum(ict_p.astype(jnp.float32) ** 2, axis=-1, keepdims=True).T   # (1, Mp)

    # One-time transpose so the kernel's MXU RHS is already (K, N).
    ict_t = ict_p.T.astype(cross_dtype)   # (D, Mp)
    ct_in = ct_p.astype(cross_dtype)      # (Np, D)

    kernel = functools.partial(_center_loss_kernel,
                               neg_two_scale=-2.0 * scale,
                               clamp_nonneg=scale >= 0.0)

    # Cost estimate: ct read once per row tile (constant block across the
    # inner j loop), init_ct^T re-streamed once per row tile, full output
    # writeback, plus the tiny norm side inputs.
    n_row_tiles = Np // tn
    cost = pl.CostEstimate(
        flops=2 * Np * Mp * D + 3 * Np * Mp,
        transcendentals=0,
        bytes_accessed=(in_bytes * Np * D
                        + in_bytes * n_row_tiles * Mp * D
                        + out_bytes * Np * Mp
                        + 4 * (Np + n_row_tiles * Mp)),
    )

    out_p = pl.pallas_call(
        kernel,
        out_shape=jax.ShapeDtypeStruct((Np, Mp), out_dtype),
        grid=(Np // tn, Mp // tm),
        in_specs=[
            pl.BlockSpec((tn, D), lambda i, j: (i, 0)),   # ct row tile
            pl.BlockSpec((D, tm), lambda i, j: (0, j)),   # init_ct^T col tile
            pl.BlockSpec((tn, 1), lambda i, j: (i, 0)),   # scale*||ct||^2
            pl.BlockSpec((1, tm), lambda i, j: (0, j)),   # scale*||init_ct||^2
        ],
        out_specs=pl.BlockSpec((tn, tm), lambda i, j: (i, j)),
        compiler_params=pltpu.CompilerParams(
            dimension_semantics=("parallel", "parallel"),
            vmem_limit_bytes=64 << 20,
        ),
        cost_estimate=cost,
    )(ct_in, ict_t, x2s, y2s)

    return out_p[:N, :M]


def center_loss_ref(ct, init_ct, *, unit: float, weight: float = 1.0):
    """Pure-JAX reference (torch.cdist(...).pow(2) / unit * weight)."""
    diff = ct[:, None, :].astype(jnp.float32) - init_ct[None, :, :].astype(jnp.float32)
    d2 = jnp.sum(diff * diff, axis=-1)
    return (d2 / unit * weight).astype(jnp.result_type(ct.dtype, init_ct.dtype))


if __name__ == "__main__":
    key = jax.random.PRNGKey(0)
    k1, k2, k3, k4 = jax.random.split(key, 4)

    # Module __init__ params (deterministic, synthetic).
    unit = 2.0
    weight = 0.5

    # Case 1: small square shapes consistent with the forward: (N, D) point sets.
    N, M, D = 16, 16, 32
    ct = jax.random.normal(k1, (N, D), dtype=jnp.float32)
    init_ct = jax.random.normal(k2, (M, D), dtype=jnp.float32)

    out = jax.block_until_ready(center_loss(ct, init_ct, unit=unit, weight=weight))
    ref = center_loss_ref(ct, init_ct, unit=unit, weight=weight)
    assert out.shape == (N, M)
    assert jnp.allclose(out, ref, atol=1e-4, rtol=1e-4)

    # Case 2: non-aligned shapes to exercise padding/slicing and a multi-tile grid.
    N2, M2 = 40, 300
    ct2 = jax.random.normal(k3, (N2, D), dtype=jnp.float32)
    init_ct2 = jax.random.normal(k4, (M2, D), dtype=jnp.float32)

    out2 = jax.block_until_ready(center_loss(ct2, init_ct2, unit=unit, weight=weight))
    ref2 = center_loss_ref(ct2, init_ct2, unit=unit, weight=weight)
    assert out2.shape == (N2, M2)
    assert jnp.allclose(out2, ref2, atol=1e-4, rtol=1e-4)

    print("KERNEL_OK")
</pallas_src>

<mosaic_0001>
module attributes {stable_mosaic.version = 11 : i64} {
  func.func @_center_loss_kernel(%arg0: i32, %arg1: i32, %arg2: memref<16x32xf32, #tpu.memory_space<vmem>>, %arg3: memref<32x128xf32, #tpu.memory_space<vmem>>, %arg4: memref<16x1xf32, #tpu.memory_space<vmem>>, %arg5: memref<1x128xf32, #tpu.memory_space<vmem>>, %arg6: memref<16x128xf32, #tpu.memory_space<vmem>>) attributes {dimension_semantics = [#tpu.dimension_semantics<parallel>, #tpu.dimension_semantics<parallel>], iteration_bounds = array<i64: 1, 1>, scalar_prefetch = 0 : i64, scratch_operands = 0 : i64, tpu.core_type = #tpu.core_type<tc>, window_params = [{transform_indices = @transform_0, window_bounds = array<i64: 16, 32>}, {transform_indices = @transform_1, window_bounds = array<i64: 32, 128>}, {transform_indices = @transform_2, window_bounds = array<i64: 16, 1>}, {transform_indices = @transform_3, window_bounds = array<i64: 1, 128>}, {transform_indices = @transform_4, window_bounds = array<i64: 16, 128>}]} {
    %c0 = arith.constant 0 : index
    %c0_0 = arith.constant 0 : index
    %0 = vector.load %arg2[%c0, %c0_0] : memref<16x32xf32, #tpu.memory_space<vmem>>, vector<16x32xf32>
    %c0_1 = arith.constant 0 : index
    %c0_2 = arith.constant 0 : index
    %1 = vector.load %arg3[%c0_1, %c0_2] : memref<32x128xf32, #tpu.memory_space<vmem>>, vector<32x128xf32>
    %cst = arith.constant dense<0.000000e+00> : vector<16x128xf32>
    %2 = tpu.matmul %0, %1, %cst {dimension_numbers = #tpu.dot_dimension_numbers<[1], [0], [0], [1], [0, 0, 1, 1], [], []>} : vector<16x32xf32>, vector<32x128xf32>, vector<16x128xf32> -> vector<16x128xf32>
    %c0_3 = arith.constant 0 : index
    %c0_4 = arith.constant 0 : index
    %3 = vector.load %arg4[%c0_3, %c0_4] : memref<16x1xf32, #tpu.memory_space<vmem>>, vector<16x1xf32>
    %c0_5 = arith.constant 0 : index
    %c0_6 = arith.constant 0 : index
    %4 = vector.load %arg5[%c0_5, %c0_6] : memref<1x128xf32, #tpu.memory_space<vmem>>, vector<1x128xf32>
    %5 = vector.broadcast %3 : vector<16x1xf32> to vector<16x128xf32>
    %6 = vector.broadcast %4 : vector<1x128xf32> to vector<16x128xf32>
    %7 = arith.addf %5, %6 : vector<16x128xf32>
    %cst_7 = arith.constant -5.000000e-01 : f32
    %8 = vector.broadcast %cst_7 : f32 to vector<16x128xf32>
    %9 = arith.mulf %8, %2 : vector<16x128xf32>
    %10 = arith.addf %7, %9 : vector<16x128xf32>
    %cst_8 = arith.constant 0.000000e+00 : f32
    %11 = vector.broadcast %cst_8 : f32 to vector<16x128xf32>
    %12 = arith.maximumf %10, %11 : vector<16x128xf32>
    %c0_9 = arith.constant 0 : index
    %c0_10 = arith.constant 0 : index
    %13 = vector.load %arg6[%c0_9, %c0_10] : memref<16x128xf32, #tpu.memory_space<vmem>>, vector<16x128xf32>
    tpu.vector_store %arg6[%c0_9, %c0_10], %12 {strides = array<i32>} : memref<16x128xf32, #tpu.memory_space<vmem>>, vector<16x128xf32>,
    return
  }
  func.func @transform_0(%arg0: i32, %arg1: i32) -> (i32, i32) {
    %c0_i32 = arith.constant 0 : i32
    %c0_i32_0 = arith.constant 0 : i32
    return %arg0, %c0_i32 : i32, i32
  }
  func.func @transform_1(%arg0: i32, %arg1: i32) -> (i32, i32) {
    %c0_i32 = arith.constant 0 : i32
    %c0_i32_0 = arith.constant 0 : i32
    return %c0_i32, %arg1 : i32, i32
  }
  func.func @transform_2(%arg0: i32, %arg1: i32) -> (i32, i32) {
    %c0_i32 = arith.constant 0 : i32
    %c0_i32_0 = arith.constant 0 : i32
    return %arg0, %c0_i32 : i32, i32
  }
  func.func @transform_3(%arg0: i32, %arg1: i32) -> (i32, i32) {
    %c0_i32 = arith.constant 0 : i32
    %c0_i32_0 = arith.constant 0 : i32
    return %c0_i32, %arg1 : i32, i32
  }
  func.func @transform_4(%arg0: i32, %arg1: i32) -> (i32, i32) {
    %c0_i32 = arith.constant 0 : i32
    return %arg0, %arg1 : i32, i32
  }
}

</mosaic_0001>

<llo_original>
// kernel: tpu_custom_call.1
$region0: #{tpu_custom_call.1}
  #allocation0 [shape = 'u32[]', space=smem, size = 0x4, offset = 0x4, fixed_abs, tag = 'smem constant byte address 0x4 - core index']
  #allocation1 [shape = 'u32[144,128]{1,0:T(1,128)}', space=vmem, size = 0x12000, scoped, tag = 'internal scratch']
  %s0 = inlined_call_operand.hbm [shape: f32[16,32], index: 0, kind: input, shape index: {}]
  %s1 = inlined_call_operand.hbm [shape: f32[32,128], index: 1, kind: input, shape index: {}]
  %s2 = inlined_call_operand.hbm [shape: f32[16,1], index: 2, kind: input, shape index: {}]
  %s3 = inlined_call_operand.hbm [shape: f32[1,128], index: 3, kind: input, shape index: {}]
  %s4 = inlined_call_operand.hbm [shape: f32[16,128], index: 4, kind: output, shape index: {}]
  %s5 = sld [smem:[#allocation0]]
  $region42: #{tpu_custom_call.1} parent=0
    _
  %s7 = ssub.s32 1, %s5
  %s8 = scalar_select 0, %s7, %s5
  $region1: #{tpu_custom_call.1} parent=0
    #allocation2 [shape = 'u8[8192]{0}', space=vmem, size = 0x2000, scoped, tag = 'input window, operand 0, single buffered']
    #allocation3 [shape = 's32[1]{0}', space=sflag, size = 0x4, scoped, tag = 'scoped memory for tpu_custom_call.1']
    #allocation4 [shape = 's32[1]{0}', space=sflag, size = 0x4, scoped, tag = 'scoped memory for tpu_custom_call.1']
    #allocation5 [shape = 'u8[16384]{0}', space=vmem, size = 0x4000, scoped, tag = 'input window, operand 1, single buffered']
    #allocation6 [shape = 's32[1]{0}', space=sflag, size = 0x4, scoped, tag = 'scoped memory for tpu_custom_call.1']
    #allocation7 [shape = 'u8[8192]{0}', space=vmem, size = 0x2000, scoped, tag = 'input window, operand 2, single buffered']
    #allocation8 [shape = 'u8[512]{0}', space=vmem, size = 0x400, scoped, tag = 'input window, operand 3, single buffered']
    #allocation9 [shape = 's32[1]{0}', space=sflag, size = 0x4, scoped, tag = 'scoped memory for tpu_custom_call.1']
    #allocation10 [shape = 'u8[8192]{0}', space=vmem, size = 0x2000, scoped, tag = 'output window, operand 0, single buffered']
    %9 = vsyncpa [#allocation3], 0
    %10 = vsyncpa [#allocation6], 0
    %11 = vsyncpa [#allocation9], 0
    %12 = vsyncpa [#allocation4], 0
    // Predicated region
    $region2: #{tpu_custom_call.1} parent=1 // pred_check
      _
    $region3: #{tpu_custom_call.1} parent=1 // pred_check_branch
      %14 = sbr.rel (0) target = $region5
    $region4: #{tpu_custom_call.1} parent=1 // pred_region
      %s16 = ssub.s32 256, 256
      %17 = vsyncadd [#allocation3], %s16
      %s18 = sshll.u32 [#allocation2], 4
      %s19 = int_to_ptr.vmem [resolvable:$true] %s18
      %24 = dma.hbm_to_vmem [thread:$0]  %s0, 256, %s19, [#allocation3], 128, 128, 8
    $region5: #{tpu_custom_call.1} parent=1 // pred_fallthru
      _
    // Predicated region
    $region6: #{tpu_custom_call.1} parent=1 // pred_check
      _
    $region7: #{tpu_custom_call.1} parent=1 // pred_check_branch
      %26 = sbr.rel (0) target = $region9
    $region8: #{tpu_custom_call.1} parent=1 // pred_region
      %s28 = ssub.s32 512, 512
      %29 = vsyncadd [#allocation6], %s28
      %s30 = sshll.u32 [#allocation5], 4
      %s31 = int_to_ptr.vmem [resolvable:$true] %s30
      %36 = dma.hbm_to_vmem [thread:$0]  %s1, 512, %s31, [#allocation6], 128, 128, 8
    $region9: #{tpu_custom_call.1} parent=1 // pred_fallthru
      _
    // Predicated region
    $region10: #{tpu_custom_call.1} parent=1 // pred_check
      _
    $region11: #{tpu_custom_call.1} parent=1 // pred_check_branch
      %38 = sbr.rel (0) target = $region13
    $region12: #{tpu_custom_call.1} parent=1 // pred_region
      %s40 = ssub.s32 256, 256
      %41 = vsyncadd [#allocation6], %s40
      %s42 = sshll.u32 [#allocation7], 4
      %s43 = int_to_ptr.vmem [resolvable:$true] %s42
      %48 = dma.hbm_to_vmem [thread:$0]  %s2, 256, %s43, [#allocation6], 128, 128, 8
    $region13: #{tpu_custom_call.1} parent=1 // pred_fallthru
      _
    // Predicated region
    $region14: #{tpu_custom_call.1} parent=1 // pred_check
      _
    $region15: #{tpu_custom_call.1} parent=1 // pred_check_branch
      %50 = sbr.rel (0) target = $region17
    $region16: #{tpu_custom_call.1} parent=1 // pred_region
      %s52 = ssub.s32 16, 16
      %53 = vsyncadd [#allocation9], %s52
      %s55 = sshll.u32 [#allocation8], 4
      %s56 = int_to_ptr.vmem [resolvable:$true] %s55
      %58 = dma.hbm_to_vmem [thread:$0]  %s3, 16, %s56, [#allocation9]
    $region17: #{tpu_custom_call.1} parent=1 // pred_fallthru
      _
    // Predicated region
    $region18: #{tpu_custom_call.1} parent=1 // pred_check
      _
    $region19: #{tpu_custom_call.1} parent=1 // pred_check_branch
      %60 = sbr.rel (0) target = $region21
    $region20: #{tpu_custom_call.1} parent=1 // pred_region
      %61 = dma.done [#allocation3], 256
    $region21: #{tpu_custom_call.1} parent=1 // pred_fallthru
      _
    // Predicated region
    $region22: #{tpu_custom_call.1} parent=1 // pred_check
      _
    $region23: #{tpu_custom_call.1} parent=1 // pred_check_branch
      %63 = sbr.rel (0) target = $region25
    $region24: #{tpu_custom_call.1} parent=1 // pred_region
      %64 = dma.done [#allocation6], 512
    $region25: #{tpu_custom_call.1} parent=1 // pred_fallthru
      _
    // Predicated region
    $region26: #{tpu_custom_call.1} parent=1 // pred_check
      _
    $region27: #{tpu_custom_call.1} parent=1 // pred_check_branch
      %66 = sbr.rel (0) target = $region29
    $region28: #{tpu_custom_call.1} parent=1 // pred_region
      %67 = dma.done [#allocation6], 256
    $region29: #{tpu_custom_call.1} parent=1 // pred_fallthru
      _
    // Predicated region
    $region30: #{tpu_custom_call.1} parent=1 // pred_check
      _
    $region31: #{tpu_custom_call.1} parent=1 // pred_check_branch
      %69 = sbr.rel (0) target = $region33
    $region32: #{tpu_custom_call.1} parent=1 // pred_region
      %70 = dma.done [#allocation9], 16
    $region33: #{tpu_custom_call.1} parent=1 // pred_fallthru
      _
    %v71 = vld [vmem:[#allocation2] sm:$0xff]
    %v72 = vld [vmem:[#allocation2 + $0x8] sm:$0xff]
    %v73 = vld [vmem:[#allocation5] sm:$0xff]
    %v74 = vld [vmem:[#allocation5 + $0x8] sm:$0xff]
    %v75 = vld [vmem:[#allocation5 + $0x10] sm:$0xff]
    %v76 = vld [vmem:[#allocation5 + $0x18] sm:$0xff]
    %vm77 = vcmask 261120
    %v79 = vsel %vm77, %v71, 0
    %v82 = vsel %vm77, %v72, 0
    %84 = vmatprep.subr.mxu0 0.0
    %85 = vmatpush1.msra.mxu0 %v73
    %86 = vmatprep.subr.mxu0 0.0
    %87 = vmatpush1.msra.mxu0 %v74
    %88 = vmatprep.subr.mxu0 0.0
    %89 = vmatpush1.msra.mxu0 %v75
    %90 = vmatprep.subr.mxu0 0.0
    %91 = vmatpush1.msra.mxu0 %v76
    %92 = vmatprep.subr.mxu0 0.0
    %93 = vmatpush1.msra.mxu0 0.0
    %94 = vmatprep.subr.mxu0 0.0
    %95 = vmatpush1.msra.mxu0 0.0
    %96 = vmatprep.subr.mxu0 0.0
    %97 = vmatpush1.msra.mxu0 0.0
    %98 = vmatprep.subr.mxu0 0.0
    %99 = vmatpush1.msra.mxu0 0.0
    %100 = vmatprep.subr.mxu0 0.0
    %101 = vmatpush1.msra.mxu0 0.0
    %102 = vmatprep.subr.mxu0 0.0
    %103 = vmatpush1.msra.mxu0 0.0
    %104 = vmatprep.subr.mxu0 0.0
    %105 = vmatpush1.msra.mxu0 0.0
    %106 = vmatprep.subr.mxu0 0.0
    %107 = vmatpush1.msra.mxu0 0.0
    %108 = vmatprep.subr.mxu0 0.0
    %109 = vmatpush1.msra.mxu0 0.0
    %110 = vmatprep.subr.mxu0 0.0
    %111 = vmatpush1.msra.mxu0 0.0
    %112 = vmatprep.subr.mxu0 0.0
    %113 = vmatpush1.msra.mxu0 0.0
    %114 = vmatprep.subr.mxu0 0.0
    %115 = vmatpush1.msra.mxu0 0.0
    %116 = vmatprep.subr.mxu0 0.0
    %117 = vmatpush1.msra.mxu0 0.0
    %118 = vmatprep.subr.mxu0 0.0
    %119 = vmatpush1.msra.mxu0 0.0
    %120 = vmatprep.subr.mxu0 0.0
    %121 = vmatpush1.msra.mxu0 0.0
    %122 = vmatprep.subr.mxu0 0.0
    %123 = vmatpush1.msra.mxu0 0.0
    %124 = vmatprep.subr.mxu0 0.0
    %125 = vmatpush1.msra.mxu0 0.0
    %126 = vmatprep.subr.mxu0 0.0
    %127 = vmatpush1.msra.mxu0 0.0
    %128 = vmatprep.subr.mxu0 0.0
    %129 = vmatpush1.msra.mxu0 0.0
    %130 = vmatprep.subr.mxu0 0.0
    %131 = vmatpush1.msra.mxu0 0.0
    %132 = vmatprep.subr.mxu0 0.0
    %133 = vmatpush1.msra.mxu0 0.0
    %134 = vmatprep.subr.mxu0 0.0
    %135 = vmatpush1.msra.mxu0 0.0
    %136 = vmatprep.subr.mxu0 0.0
    %137 = vmatpush1.msra.mxu0 0.0
    %138 = vmatprep.subr.mxu0 0.0
    %139 = vmatpush1.msra.mxu0 0.0
    %140 = vmatprep.subr.mxu0 0.0
    %141 = vmatpush1.msra.mxu0 0.0
    %142 = vmatprep.subr.mxu0 0.0
    %143 = vmatpush1.msra.mxu0 0.0
    %144 = vmatprep.subr.mxu0 0.0
    %145 = vmatpush1.msra.mxu0 0.0
    %146 = vmatprep.subr.mxu0 0.0
    %147 = vmatpush1.msra.mxu0 0.0
    %148 = vmatprep.mubr.f32.mxu0 0.0
    %149 = vmatmul.mubr.f32.gmra.mrb[0].mxu0 %v79
    %v150 = vpop.f32.mrb[0].mxu0
    %v151 = vadd.f32 0.0, %v150
    %v152 = vpop.f32.mrb[0].mxu0
    %153 = vmatprep.mubr.f32.mxu0 0.0
    %154 = vmatmul.mubr.f32.gmra.mrb[0].mxu0 %v82
    %v155 = vpop.f32.mrb[0].mxu0
    %v156 = vadd.f32 0.0, %v155
    %v157 = vpop.f32.mrb[0].mxu0
    %158 = vdwg.mxu0
    %v159 = vld [vmem:[#allocation7] sm:$0xff]
    %v160 = vld [vmem:[#allocation7 + $0x8] sm:$0xff]
    %v161 = vld [vmem:[#allocation8] sm:$0x1]
    %163 = vset.pattern.permute.xlu0 0
    %164 = vperm.xlu0 %163, %v159
    %v165 = vpop.permute.xlu0 %164
    %168 = vset.pattern.permute.xlu0 0
    %169 = vperm.xlu0 %168, %v160
    %v170 = vpop.permute.xlu0 %169
    %v173 = vlaneseq
    %v174 = vshrl.u32 %v173, 7
    %v175 = vsub.s32 0, %v174
    %v176 = vrot.slane %v161, %v175
    %v178 = vadd.f32 %v165, %v176
    %v179 = vadd.f32 %v170, %v176
    %v180 = vmul.f32 %v151, -0.5
    %v181 = vmul.f32 %v156, -0.5
    %v182 = vadd.f32 %v178, %v180
    %v183 = vadd.f32 %v179, %v181
    %v184 = vmax.f32 %v182, 0.0
    %v185 = vmax.f32 %v183, 0.0
    %186 = vst [vmem:[#allocation10] sm:$0xff] %v184
    %187 = vst [vmem:[#allocation10 + $0x8] sm:$0xff] %v185
    // Predicated region
    $region34: #{tpu_custom_call.1} parent=1 // pred_check
      _
    $region35: #{tpu_custom_call.1} parent=1 // pred_check_branch
      %189 = sbr.rel (0) target = $region37
    $region36: #{tpu_custom_call.1} parent=1 // pred_region
      %s191 = ssub.s32 256, 256
      %192 = vsyncadd [#allocation4], %s191
      %s193 = sshll.u32 [#allocation10], 4
      %s194 = int_to_ptr.vmem [resolvable:$true] %s193
      %199 = dma.vmem_to_hbm [thread:$0]  %s194, 256, %s4, [#allocation4], 128, 128, 8
    $region37: #{tpu_custom_call.1} parent=1 // pred_fallthru
      _
    // Predicated region
    $region38: #{tpu_custom_call.1} parent=1 // pred_check
      _
    $region39: #{tpu_custom_call.1} parent=1 // pred_check_branch
      %201 = sbr.rel (0) target = $region41
    $region40: #{tpu_custom_call.1} parent=1 // pred_region
      %202 = dma.done [#allocation4], 256
    $region41: #{tpu_custom_call.1} parent=1 // pred_fallthru
      _
    %203 = vsyncpa [#allocation3], 1
    %204 = vsyncpa [#allocation6], 1
    %205 = vsyncpa [#allocation9], 1
    %206 = vsyncpa [#allocation4], 1

</llo_original>
